<compile_context>
chip_gen: v7x
topology: tpu7x:2x2x1
jax: 0.10.0
libtpu: 0.0.40
codegen_flags: <defaults>
</compile_context>

<pallas_src>
import jax
import jax.numpy as jnp
from jax.experimental import pallas as pl
from jax.experimental.pallas import tpu as pltpu


# ----------------------------------------------------------------------------
# VMEM sizing helpers (lane/sublane-padded, per-generation budget).
# ----------------------------------------------------------------------------
def _round_up(x, m):
    return ((int(x) + m - 1) // m) * m


def _sublane(dtype):
    # Sublane packing: 8 rows for 4-byte, 16 for 2-byte, 32 for 1-byte dtypes.
    return max(8, 32 // jnp.dtype(dtype).itemsize)


def _padded_bytes(shape, dtype):
    """VMEM bytes of one buffer holding `shape`, with (sublane, 128-lane) padding."""
    itemsize = jnp.dtype(dtype).itemsize
    if len(shape) < 2:
        n = int(shape[0]) if shape else 1
        return _round_up(n, 128) * max(itemsize, 4)
    lead = 1
    for d in shape[:-2]:
        lead *= int(d)
    rows = _round_up(shape[-2], _sublane(dtype))
    cols = _round_up(shape[-1], 128)
    return lead * rows * cols * itemsize


def _vmem_physical_bytes():
    """Best-effort physical VMEM per TensorCore (128 MiB v4/v5e/v6e, 64 MiB v7x)."""
    try:
        info = pltpu.get_tpu_info()
        for attr in ("vmem_capacity_bytes", "vmem_bytes", "vmem_size_bytes"):
            v = getattr(info, attr, None)
            if v:
                return int(v)
    except Exception:
        pass
    try:
        kind = jax.devices()[0].device_kind.lower()
    except Exception:
        kind = ""
    if "v7" in kind or "tpu7" in kind:
        return 64 * 1024 * 1024
    if "v4" in kind or "v5" in kind or "v6" in kind:
        return 128 * 1024 * 1024
    return 64 * 1024 * 1024          # conservative default for unknown parts


def _default_vmem_budget():
    # ~75% of physical VMEM (~96 MiB v5e/v6e, ~48 MiB v7x). Used both for
    # planning and as vmem_limit_bytes (scoped default is only 16/32 MiB).
    return (_vmem_physical_bytes() * 3) // 4


def _pick_row_tile(n, resident_bytes, per_row_bytes, budget_bytes, align):
    avail = budget_bytes - resident_bytes
    tm = avail // max(per_row_bytes, 1) if avail > 0 else align
    tm = int(max(align, min(tm, n)))
    if tm < n:
        tm = max(align, (tm // align) * align)
    return min(tm, n)


def _resolve_row_tile(n, row_tile, align, auto_fn):
    if row_tile is None:
        return auto_fn()
    tm = min(int(row_tile), n)
    if tm < n:
        tm = max(align, (tm // align) * align)
    return tm


# ----------------------------------------------------------------------------
# Fused two-layer kernel (adjacency fully VMEM-resident, read from HBM once,
# no grid => single-buffered inputs, no pipeline overhead).
# ----------------------------------------------------------------------------
def _gcn_fused_kernel(adj_ref, z_ref, w1_ref, w4_ref, out_ref):
    adj = adj_ref[...]
    cdt = adj.dtype
    # Layer 1: relu((g @ z) @ W1_t). z is only in_dim wide, so the adjacency is
    # contracted against the narrow operand first.
    az = jnp.dot(adj, z_ref[...], preferred_element_type=jnp.float32)
    z1 = jnp.maximum(
        jnp.dot(az.astype(cdt), w1_ref[...], preferred_element_type=jnp.float32),
        0.0)
    # Layer 2 re-associated: g @ (z1 @ W4_t) (out_dim < hid_dim => fewer MACs).
    # Intermediates are cast back to the compute dtype so the dominant N x N
    # matmul stays on the bf16 MXU path when compute_dtype=bf16.
    zw = jnp.dot(z1.astype(cdt), w4_ref[...], preferred_element_type=jnp.float32)
    h = jnp.dot(adj, zw.astype(cdt), preferred_element_type=jnp.float32)
    out_ref[...] = jax.nn.sigmoid(h).astype(out_ref.dtype)


def _fused_vmem_bytes(n, in_dim, hid_dim, out_dim, cdt, out_dtype):
    b = 0
    # Inputs + output: single-buffered (no grid => no pipeline double-buffering).
    b += _padded_bytes((n, n), cdt)
    b += _padded_bytes((n, in_dim), cdt)
    b += _padded_bytes((in_dim, hid_dim), cdt)
    b += _padded_bytes((hid_dim, out_dim), cdt)
    b += _padded_bytes((n, out_dim), out_dtype)
    # f32 accumulators (az, z1, zw, h) plus their compute-dtype casts.
    for d in (in_dim, hid_dim, out_dim, out_dim):
        b += _padded_bytes((n, d), jnp.float32)
    for d in (in_dim, hid_dim, out_dim):
        b += _padded_bytes((n, d), cdt)
    return b


def gcn_forward_fused(g, z, w1_t, w4_t, out_dtype, vmem_limit_bytes):
    n = g.shape[0]
    in_dim, hid_dim = w1_t.shape
    out_dim = w4_t.shape[1]
    csize = jnp.dtype(g.dtype).itemsize
    flops = 2 * n * (n * in_dim + in_dim * hid_dim + hid_dim * out_dim
                     + n * out_dim)
    bytes_accessed = (csize * (n * n + n * in_dim + in_dim * hid_dim
                               + hid_dim * out_dim)
                      + jnp.dtype(out_dtype).itemsize * n * out_dim)
    return pl.pallas_call(
        _gcn_fused_kernel,
        out_shape=jax.ShapeDtypeStruct((n, out_dim), out_dtype),
        compiler_params=pltpu.CompilerParams(
            vmem_limit_bytes=int(vmem_limit_bytes)),
        cost_estimate=pl.CostEstimate(
            flops=int(flops),
            transcendentals=int(n * out_dim),        # sigmoid ~ 1 exp / element
            bytes_accessed=int(bytes_accessed)),
    )(g, z, w1_t, w4_t)


# ----------------------------------------------------------------------------
# Row-tiled fallback (adjacency too large for VMEM): two streaming kernels.
#   Layer 1:  zw  = relu((g @ z) @ W1_t) @ W4_t     (W4 folded into epilogue)
#   Layer 2:  out = sigmoid(g @ zw)
# ----------------------------------------------------------------------------
def _layer1_tiled_kernel(adj_ref, z_ref, w1_ref, w4_ref, zw_ref):
    cdt = adj_ref.dtype
    az = jnp.dot(adj_ref[...], z_ref[...], preferred_element_type=jnp.float32)
    z1 = jnp.maximum(
        jnp.dot(az.astype(cdt), w1_ref[...], preferred_element_type=jnp.float32),
        0.0)
    zw = jnp.dot(z1.astype(cdt), w4_ref[...], preferred_element_type=jnp.float32)
    zw_ref[...] = zw.astype(zw_ref.dtype)


def gcn_layer1_tiled(g, z, w1_t, w4_t, *, row_tile, vmem_budget_bytes):
    n = g.shape[0]
    in_dim, hid_dim = w1_t.shape
    out_dim = w4_t.shape[1]
    cdt = g.dtype
    csize = jnp.dtype(cdt).itemsize
    align = _sublane(cdt)

    # Pipeline operands conservatively counted double-buffered.
    resident = 2 * (_padded_bytes((n, in_dim), cdt)
                    + _padded_bytes((in_dim, hid_dim), cdt)
                    + _padded_bytes((hid_dim, out_dim), cdt))
    per_row = (2 * _round_up(n, 128) * csize                       # adj slab x2
               + 2 * _round_up(out_dim, 128) * csize               # zw out x2
               + 4 * (_round_up(in_dim, 128) + _round_up(hid_dim, 128)
                      + _round_up(out_dim, 128))                   # f32 temps
               + csize * (_round_up(in_dim, 128) + _round_up(hid_dim, 128)))

    tm = _resolve_row_tile(
        n, row_tile, align,
        lambda: _pick_row_tile(n, resident, per_row, vmem_budget_bytes, align))
    n_blocks = pl.cdiv(n, tm)

    flops = 2 * n * (n * in_dim + in_dim * hid_dim + hid_dim * out_dim)
    bytes_accessed = csize * (n * n + n * in_dim + in_dim * hid_dim
                              + hid_dim * out_dim + n * out_dim)

    return pl.pallas_call(
        _layer1_tiled_kernel,
        out_shape=jax.ShapeDtypeStruct((n, out_dim), cdt),
        grid_spec=pl.GridSpec(
            grid=(n_blocks,),
            in_specs=[
                pl.BlockSpec((tm, n), lambda i: (i, 0)),            # adj row slab
                pl.BlockSpec((n, in_dim), lambda i: (0, 0)),        # z, resident
                pl.BlockSpec((in_dim, hid_dim), lambda i: (0, 0)),
                pl.BlockSpec((hid_dim, out_dim), lambda i: (0, 0)),
            ],
            out_specs=pl.BlockSpec((tm, out_dim), lambda i: (i, 0)),
        ),
        compiler_params=pltpu.CompilerParams(
            dimension_semantics=("parallel",),       # row blocks independent
            vmem_limit_bytes=int(vmem_budget_bytes)),
        cost_estimate=pl.CostEstimate(
            flops=int(flops), transcendentals=0,
            bytes_accessed=int(bytes_accessed)),
    )(g, z, w1_t, w4_t)


def _layer2_tiled_kernel(adj_ref, zw_ref, out_ref):
    h = jnp.dot(adj_ref[...], zw_ref[...], preferred_element_type=jnp.float32)
    out_ref[...] = jax.nn.sigmoid(h).astype(out_ref.dtype)


def gcn_layer2_tiled(g, zw, out_dtype, *, row_tile, vmem_budget_bytes):
    n = g.shape[0]
    out_dim = zw.shape[1]
    cdt = g.dtype
    csize = jnp.dtype(cdt).itemsize
    osize = jnp.dtype(out_dtype).itemsize
    align = _sublane(cdt)

    resident = 2 * _padded_bytes((n, out_dim), zw.dtype)
    per_row = (2 * _round_up(n, 128) * csize
               + 2 * _round_up(out_dim, 128) * osize
               + 4 * _round_up(out_dim, 128))                       # f32 h row

    tm = _resolve_row_tile(
        n, row_tile, align,
        lambda: _pick_row_tile(n, resident, per_row, vmem_budget_bytes, align))
    n_blocks = pl.cdiv(n, tm)

    flops = 2 * n * n * out_dim
    bytes_accessed = (csize * n * n
                      + jnp.dtype(zw.dtype).itemsize * n * out_dim
                      + osize * n * out_dim)

    return pl.pallas_call(
        _layer2_tiled_kernel,
        out_shape=jax.ShapeDtypeStruct((n, out_dim), out_dtype),
        grid_spec=pl.GridSpec(
            grid=(n_blocks,),
            in_specs=[
                pl.BlockSpec((tm, n), lambda i: (i, 0)),            # adj row slab
                pl.BlockSpec((n, out_dim), lambda i: (0, 0)),       # zw, resident
            ],
            out_specs=pl.BlockSpec((tm, out_dim), lambda i: (i, 0)),
        ),
        compiler_params=pltpu.CompilerParams(
            dimension_semantics=("parallel",),
            vmem_limit_bytes=int(vmem_budget_bytes)),
        cost_estimate=pl.CostEstimate(
            flops=int(flops), transcendentals=int(n * out_dim),
            bytes_accessed=int(bytes_accessed)),
    )(g, zw)


# ----------------------------------------------------------------------------
# Forward pass.
# ----------------------------------------------------------------------------
def gcn_forward(g, z, w1_t, w4_t, *, compute_dtype=jnp.bfloat16,
                force_tiled=False, row_tile=None, vmem_budget_bytes=None):
    """GCN.forward: res = sigmoid(g @ relu(g @ z @ W1^T) @ W4^T).

    `w1_t` / `w4_t` are the PyTorch Linear weights pre-transposed to
    (in_dim, out_dim) once at parameter-setup time (never inside the forward).
    Compute defaults to bf16 (halves the N^2 adjacency HBM traffic, doubles
    MXU rate); accumulation is f32 and the output keeps z.dtype.
    Pass compute_dtype=jnp.float32 for exact-f32 semantics.
    """
    out_dtype = z.dtype
    if compute_dtype is None:
        compute_dtype = g.dtype
    compute_dtype = jnp.dtype(compute_dtype)
    g = g.astype(compute_dtype)
    z = z.astype(compute_dtype)
    w1_t = w1_t.astype(compute_dtype)
    w4_t = w4_t.astype(compute_dtype)

    if vmem_budget_bytes is None:
        vmem_budget_bytes = _default_vmem_budget()
    vmem_budget_bytes = int(vmem_budget_bytes)

    n = g.shape[0]
    in_dim, hid_dim = w1_t.shape
    out_dim = w4_t.shape[1]

    fused_bytes = _fused_vmem_bytes(n, in_dim, hid_dim, out_dim,
                                    compute_dtype, out_dtype)
    if not force_tiled and (fused_bytes * 9) // 8 <= vmem_budget_bytes:
        # Adjacency read from HBM once; intermediates never leave VMEM.
        return gcn_forward_fused(g, z, w1_t, w4_t, out_dtype, vmem_budget_bytes)

    # Large-graph fallback: adjacency streamed once per layer in row slabs.
    zw = gcn_layer1_tiled(g, z, w1_t, w4_t, row_tile=row_tile,
                          vmem_budget_bytes=vmem_budget_bytes)
    return gcn_layer2_tiled(g, zw, out_dtype, row_tile=row_tile,
                            vmem_budget_bytes=vmem_budget_bytes)


def xavier_uniform(key, out_dim, in_dim, dtype=jnp.float32):
    # Matches torch.nn.init.xavier_uniform_ on a (out_dim, in_dim) Linear weight.
    bound = (6.0 / (in_dim + out_dim)) ** 0.5
    return jax.random.uniform(key, (out_dim, in_dim), dtype, -bound, bound)


if __name__ == "__main__":
    # Small shapes consistent with the module: N nodes, out_dim input/output
    # feature width, hid_dim hidden width.
    N, hid_dim, out_dim = 64, 32, 16

    key = jax.random.PRNGKey(0)
    k_g, k_z, k_w1, k_w4 = jax.random.split(key, 4)

    # Symmetric, row-normalized-ish dense adjacency (deterministic).
    a = jax.random.uniform(k_g, (N, N), jnp.float32)
    g = (a + a.T) * 0.5 / N
    z = jax.random.normal(k_z, (N, out_dim), jnp.float32)

    # PyTorch Linear weights are (out_features, in_features); transpose ONCE
    # here, outside the forward (no per-call .T).
    w1 = xavier_uniform(k_w1, hid_dim, out_dim)   # res1: out_dim -> hid_dim
    w4 = xavier_uniform(k_w4, out_dim, hid_dim)   # res4: hid_dim -> out_dim
    w1_t, w4_t = w1.T, w4.T

    # Pure-JAX reference of the same math (bias=False, eval-mode dropout).
    ref1 = jnp.maximum(g @ z @ w1.T, 0.0)
    ref = jax.nn.sigmoid(g @ ref1 @ w4.T)

    # 1) Exact-f32 fused path (adjacency VMEM-resident, read once).
    res_f32 = jax.block_until_ready(
        gcn_forward(g, z, w1_t, w4_t, compute_dtype=jnp.float32))
    assert res_f32.shape == (N, out_dim)
    assert jnp.allclose(res_f32, ref, atol=1e-5, rtol=1e-5)

    # 2) f32 row-tiled fallback, including a ragged last row block (tile 48).
    res_tiled = jax.block_until_ready(
        gcn_forward(g, z, w1_t, w4_t, compute_dtype=jnp.float32,
                    force_tiled=True, row_tile=48))
    assert jnp.allclose(res_tiled, ref, atol=1e-5, rtol=1e-5)

    # 3) Default path: bf16 compute, f32 accumulation + f32 output (fused).
    res_bf16 = jax.block_until_ready(gcn_forward(g, z, w1_t, w4_t))
    assert res_bf16.dtype == jnp.float32
    assert jnp.allclose(res_bf16, ref, atol=3e-2, rtol=3e-2)

    # 4) Default bf16 compute through the row-tiled fallback path.
    res_bf16_t = jax.block_until_ready(
        gcn_forward(g, z, w1_t, w4_t, force_tiled=True, row_tile=32))
    assert jnp.allclose(res_bf16_t, ref, atol=3e-2, rtol=3e-2)

    print("KERNEL_OK")
</pallas_src>

<mosaic_0001>
module attributes {stable_mosaic.version = 11 : i64} {
  func.func @_gcn_fused_kernel(%arg0: memref<64x64xf32, #tpu.memory_space<vmem>>, %arg1: memref<64x16xf32, #tpu.memory_space<vmem>>, %arg2: memref<16x32xf32, #tpu.memory_space<vmem>>, %arg3: memref<32x16xf32, #tpu.memory_space<vmem>>, %arg4: memref<64x16xf32, #tpu.memory_space<vmem>>) attributes {dimension_semantics = [], scalar_prefetch = 0 : i64, scratch_operands = 0 : i64, tpu.core_type = #tpu.core_type<tc>} {
    %c0 = arith.constant 0 : index
    %c0_0 = arith.constant 0 : index
    %0 = vector.load %arg0[%c0, %c0_0] : memref<64x64xf32, #tpu.memory_space<vmem>>, vector<64x64xf32>
    %c0_1 = arith.constant 0 : index
    %c0_2 = arith.constant 0 : index
    %1 = vector.load %arg1[%c0_1, %c0_2] : memref<64x16xf32, #tpu.memory_space<vmem>>, vector<64x16xf32>
    %cst = arith.constant dense<0.000000e+00> : vector<64x16xf32>
    %2 = tpu.matmul %0, %1, %cst {dimension_numbers = #tpu.dot_dimension_numbers<[1], [0], [0], [1], [0, 0, 1, 1], [], []>} : vector<64x64xf32>, vector<64x16xf32>, vector<64x16xf32> -> vector<64x16xf32>
    %c0_3 = arith.constant 0 : index
    %c0_4 = arith.constant 0 : index
    %3 = vector.load %arg2[%c0_3, %c0_4] : memref<16x32xf32, #tpu.memory_space<vmem>>, vector<16x32xf32>
    %cst_5 = arith.constant dense<0.000000e+00> : vector<64x32xf32>
    %4 = tpu.matmul %2, %3, %cst_5 {dimension_numbers = #tpu.dot_dimension_numbers<[1], [0], [0], [1], [0, 0, 1, 1], [], []>} : vector<64x16xf32>, vector<16x32xf32>, vector<64x32xf32> -> vector<64x32xf32>
    %cst_6 = arith.constant 0.000000e+00 : f32
    %5 = vector.broadcast %cst_6 : f32 to vector<64x32xf32>
    %6 = arith.maximumf %4, %5 : vector<64x32xf32>
    %c0_7 = arith.constant 0 : index
    %c0_8 = arith.constant 0 : index
    %7 = vector.load %arg3[%c0_7, %c0_8] : memref<32x16xf32, #tpu.memory_space<vmem>>, vector<32x16xf32>
    %cst_9 = arith.constant dense<0.000000e+00> : vector<64x16xf32>
    %8 = tpu.matmul %6, %7, %cst_9 {dimension_numbers = #tpu.dot_dimension_numbers<[1], [0], [0], [1], [0, 0, 1, 1], [], []>} : vector<64x32xf32>, vector<32x16xf32>, vector<64x16xf32> -> vector<64x16xf32>
    %cst_10 = arith.constant dense<0.000000e+00> : vector<64x16xf32>
    %9 = tpu.matmul %0, %8, %cst_10 {dimension_numbers = #tpu.dot_dimension_numbers<[1], [0], [0], [1], [0, 0, 1, 1], [], []>} : vector<64x64xf32>, vector<64x16xf32>, vector<64x16xf32> -> vector<64x16xf32>
    %10 = arith.negf %9 : vector<64x16xf32>
    %11 = math.exp %10 : vector<64x16xf32>
    %cst_11 = arith.constant 1.000000e+00 : f32
    %12 = vector.broadcast %cst_11 : f32 to vector<64x16xf32>
    %13 = arith.addf %12, %11 : vector<64x16xf32>
    %14 = arith.divf %12, %13 : vector<64x16xf32>
    %c0_12 = arith.constant 0 : index
    %c0_13 = arith.constant 0 : index
    %15 = vector.load %arg4[%c0_12, %c0_13] : memref<64x16xf32, #tpu.memory_space<vmem>>, vector<64x16xf32>
    tpu.vector_store %arg4[%c0_12, %c0_13], %14 {strides = array<i32>} : memref<64x16xf32, #tpu.memory_space<vmem>>, vector<64x16xf32>,
    return
  }
}

</mosaic_0001>

<llo_original>
// kernel: tpu_custom_call.1
$region0: #{tpu_custom_call.1}
  #allocation0 [shape = 'u32[]', space=smem, size = 0x4, offset = 0x4, fixed_abs, tag = 'smem constant byte address 0x4 - core index']
  #allocation1 [shape = 'u32[144,128]{1,0:T(1,128)}', space=vmem, size = 0x12000, scoped, tag = 'internal scratch']
  %s0 = inlined_call_operand.vmem [shape: f32[64,64], index: 0, kind: input, shape index: {}]
  %s1 = inlined_call_operand.vmem [shape: f32[64,16], index: 1, kind: input, shape index: {}]
  %s2 = inlined_call_operand.vmem [shape: f32[16,32], index: 2, kind: input, shape index: {}]
  %s3 = inlined_call_operand.vmem [shape: f32[32,16], index: 3, kind: input, shape index: {}]
  %s4 = inlined_call_operand.vmem [shape: f32[64,16], index: 4, kind: output, shape index: {}]
  %s5 = sld [smem:[#allocation0]]
  $region26: #{tpu_custom_call.1} parent=0
    _
  %s7 = ssub.s32 1, %s5
  %s8 = scalar_select 0, %s7, %s5
  // Predicated region
  $region2: #{tpu_custom_call.1} parent=0 // pred_check
    _
  $region3: #{tpu_custom_call.1} parent=0 // pred_check_branch
    %10 = sbr.rel (0) target = $region5
  $region4: #{tpu_custom_call.1} parent=0 // pred_region
    _
  $region5: #{tpu_custom_call.1} parent=0 // pred_fallthru
    _
  // Predicated region
  $region6: #{tpu_custom_call.1} parent=0 // pred_check
    _
  $region7: #{tpu_custom_call.1} parent=0 // pred_check_branch
    %12 = sbr.rel (0) target = $region9
  $region8: #{tpu_custom_call.1} parent=0 // pred_region
    _
  $region9: #{tpu_custom_call.1} parent=0 // pred_fallthru
    _
  // Predicated region
  $region10: #{tpu_custom_call.1} parent=0 // pred_check
    _
  $region11: #{tpu_custom_call.1} parent=0 // pred_check_branch
    %14 = sbr.rel (0) target = $region13
  $region12: #{tpu_custom_call.1} parent=0 // pred_region
    _
  $region13: #{tpu_custom_call.1} parent=0 // pred_fallthru
    _
  // Predicated region
  $region14: #{tpu_custom_call.1} parent=0 // pred_check
    _
  $region15: #{tpu_custom_call.1} parent=0 // pred_check_branch
    %16 = sbr.rel (0) target = $region17
  $region16: #{tpu_custom_call.1} parent=0 // pred_region
    _
  $region17: #{tpu_custom_call.1} parent=0 // pred_fallthru
    _
  %v17 = vld [vmem:[%s0] sm:$0xff]
  %v18 = vld [vmem:[%s0 + $0x8] sm:$0xff]
  %v19 = vld [vmem:[%s0 + $0x10] sm:$0xff]
  %v20 = vld [vmem:[%s0 + $0x18] sm:$0xff]
  %v21 = vld [vmem:[%s0 + $0x20] sm:$0xff]
  %v22 = vld [vmem:[%s0 + $0x28] sm:$0xff]
  %v23 = vld [vmem:[%s0 + $0x30] sm:$0xff]
  %v24 = vld [vmem:[%s0 + $0x38] sm:$0xff]
  %v25 = vld [vmem:[%s1] sm:$0xff]
  %v26 = vld [vmem:[%s1 + $0x8] sm:$0xff]
  %v27 = vld [vmem:[%s1 + $0x10] sm:$0xff]
  %v28 = vld [vmem:[%s1 + $0x18] sm:$0xff]
  %v29 = vld [vmem:[%s1 + $0x20] sm:$0xff]
  %v30 = vld [vmem:[%s1 + $0x28] sm:$0xff]
  %v31 = vld [vmem:[%s1 + $0x30] sm:$0xff]
  %v32 = vld [vmem:[%s1 + $0x38] sm:$0xff]
  %vm33 = vcmask 523264
  %v35 = vsel %vm33, %v17, 0
  %v38 = vsel %vm33, %v18, 0
  %v41 = vsel %vm33, %v19, 0
  %v44 = vsel %vm33, %v20, 0
  %v47 = vsel %vm33, %v21, 0
  %v50 = vsel %vm33, %v22, 0
  %v53 = vsel %vm33, %v23, 0
  %v56 = vsel %vm33, %v24, 0
  %58 = vmatprep.subr.mxu0 0.0
  %59 = vmatpush1.msra.mxu0 %v25
  %60 = vmatprep.subr.mxu0 0.0
  %61 = vmatpush1.msra.mxu0 %v26
  %62 = vmatprep.subr.mxu0 0.0
  %63 = vmatpush1.msra.mxu0 %v27
  %64 = vmatprep.subr.mxu0 0.0
  %65 = vmatpush1.msra.mxu0 %v28
  %66 = vmatprep.subr.mxu0 0.0
  %67 = vmatpush1.msra.mxu0 %v29
  %68 = vmatprep.subr.mxu0 0.0
  %69 = vmatpush1.msra.mxu0 %v30
  %70 = vmatprep.subr.mxu0 0.0
  %71 = vmatpush1.msra.mxu0 %v31
  %72 = vmatprep.subr.mxu0 0.0
  %73 = vmatpush1.msra.mxu0 %v32
  %74 = vmatprep.subr.mxu0 0.0
  %75 = vmatpush1.msra.mxu0 0.0
  %76 = vmatprep.subr.mxu0 0.0
  %77 = vmatpush1.msra.mxu0 0.0
  %78 = vmatprep.subr.mxu0 0.0
  %79 = vmatpush1.msra.mxu0 0.0
  %80 = vmatprep.subr.mxu0 0.0
  %81 = vmatpush1.msra.mxu0 0.0
  %82 = vmatprep.subr.mxu0 0.0
  %83 = vmatpush1.msra.mxu0 0.0
  %84 = vmatprep.subr.mxu0 0.0
  %85 = vmatpush1.msra.mxu0 0.0
  %86 = vmatprep.subr.mxu0 0.0
  %87 = vmatpush1.msra.mxu0 0.0
  %88 = vmatprep.subr.mxu0 0.0
  %89 = vmatpush1.msra.mxu0 0.0
  %90 = vmatprep.subr.mxu0 0.0
  %91 = vmatpush1.msra.mxu0 0.0
  %92 = vmatprep.subr.mxu0 0.0
  %93 = vmatpush1.msra.mxu0 0.0
  %94 = vmatprep.subr.mxu0 0.0
  %95 = vmatpush1.msra.mxu0 0.0
  %96 = vmatprep.subr.mxu0 0.0
  %97 = vmatpush1.msra.mxu0 0.0
  %98 = vmatprep.subr.mxu0 0.0
  %99 = vmatpush1.msra.mxu0 0.0
  %100 = vmatprep.subr.mxu0 0.0
  %101 = vmatpush1.msra.mxu0 0.0
  %102 = vmatprep.subr.mxu0 0.0
  %103 = vmatpush1.msra.mxu0 0.0
  %104 = vmatprep.subr.mxu0 0.0
  %105 = vmatpush1.msra.mxu0 0.0
  %106 = vmatprep.subr.mxu0 0.0
  %107 = vmatpush1.msra.mxu0 0.0
  %108 = vmatprep.subr.mxu0 0.0
  %109 = vmatpush1.msra.mxu0 0.0
  %110 = vmatprep.subr.mxu0 0.0
  %111 = vmatpush1.msra.mxu0 0.0
  %112 = vmatprep.subr.mxu0 0.0
  %113 = vmatpush1.msra.mxu0 0.0
  %114 = vmatprep.subr.mxu0 0.0
  %115 = vmatpush1.msra.mxu0 0.0
  %116 = vmatprep.subr.mxu0 0.0
  %117 = vmatpush1.msra.mxu0 0.0
  %118 = vmatprep.subr.mxu0 0.0
  %119 = vmatpush1.msra.mxu0 0.0
  %120 = vmatprep.subr.mxu0 0.0
  %121 = vmatpush1.msra.mxu0 0.0
  %122 = vmatprep.mubr.f32.mxu0 0.0
  %123 = vmatmul.mubr.f32.gmra.mrb[0].mxu0 %v35
  %v124 = vpop.f32.mrb[0].mxu0
  %v125 = vadd.f32 0.0, %v124
  %v126 = vpop.f32.mrb[0].mxu0
  %127 = vmatprep.mubr.f32.mxu0 0.0
  %128 = vmatmul.mubr.f32.gmra.mrb[0].mxu0 %v38
  %v129 = vpop.f32.mrb[0].mxu0
  %v130 = vadd.f32 0.0, %v129
  %v131 = vpop.f32.mrb[0].mxu0
  %132 = vmatprep.mubr.f32.mxu0 0.0
  %133 = vmatmul.mubr.f32.gmra.mrb[0].mxu0 %v41
  %v134 = vpop.f32.mrb[0].mxu0
  %v135 = vadd.f32 0.0, %v134
  %v136 = vpop.f32.mrb[0].mxu0
  %137 = vmatprep.mubr.f32.mxu0 0.0
  %138 = vmatmul.mubr.f32.gmra.mrb[0].mxu0 %v44
  %v139 = vpop.f32.mrb[0].mxu0
  %v140 = vadd.f32 0.0, %v139
  %v141 = vpop.f32.mrb[0].mxu0
  %142 = vmatprep.mubr.f32.mxu0 0.0
  %143 = vmatmul.mubr.f32.gmra.mrb[0].mxu0 %v47
  %v144 = vpop.f32.mrb[0].mxu0
  %v145 = vadd.f32 0.0, %v144
  %v146 = vpop.f32.mrb[0].mxu0
  %147 = vmatprep.mubr.f32.mxu0 0.0
  %148 = vmatmul.mubr.f32.gmra.mrb[0].mxu0 %v50
  %v149 = vpop.f32.mrb[0].mxu0
  %v150 = vadd.f32 0.0, %v149
  %v151 = vpop.f32.mrb[0].mxu0
  %152 = vmatprep.mubr.f32.mxu0 0.0
  %153 = vmatmul.mubr.f32.gmra.mrb[0].mxu0 %v53
  %v154 = vpop.f32.mrb[0].mxu0
  %v155 = vadd.f32 0.0, %v154
  %v156 = vpop.f32.mrb[0].mxu0
  %157 = vmatprep.mubr.f32.mxu0 0.0
  %158 = vmatmul.mubr.f32.gmra.mrb[0].mxu0 %v56
  %v159 = vpop.f32.mrb[0].mxu0
  %v160 = vadd.f32 0.0, %v159
  %v161 = vpop.f32.mrb[0].mxu0
  %162 = vdwg.mxu0
  %v163 = vld [vmem:[%s2] sm:$0xff]
  %v164 = vld [vmem:[%s2 + $0x8] sm:$0xff]
  %vm165 = vcmask 130048
  %v167 = vsel %vm165, %v125, 0
  %v170 = vsel %vm165, %v130, 0
  %v173 = vsel %vm165, %v135, 0
  %v176 = vsel %vm165, %v140, 0
  %v179 = vsel %vm165, %v145, 0
  %v182 = vsel %vm165, %v150, 0
  %v185 = vsel %vm165, %v155, 0
  %v188 = vsel %vm165, %v160, 0
  %190 = vmatprep.subr.mxu0 0.0
  %191 = vmatpush1.msra.mxu0 %v163
  %192 = vmatprep.subr.mxu0 0.0
  %193 = vmatpush1.msra.mxu0 %v164
  %194 = vmatprep.subr.mxu0 0.0
  %195 = vmatpush1.msra.mxu0 0.0
  %196 = vmatprep.subr.mxu0 0.0
  %197 = vmatpush1.msra.mxu0 0.0
  %198 = vmatprep.subr.mxu0 0.0
  %199 = vmatpush1.msra.mxu0 0.0
  %200 = vmatprep.subr.mxu0 0.0
  %201 = vmatpush1.msra.mxu0 0.0
  %202 = vmatprep.subr.mxu0 0.0
  %203 = vmatpush1.msra.mxu0 0.0
  %204 = vmatprep.subr.mxu0 0.0
  %205 = vmatpush1.msra.mxu0 0.0
  %206 = vmatprep.subr.mxu0 0.0
  %207 = vmatpush1.msra.mxu0 0.0
  %208 = vmatprep.subr.mxu0 0.0
  %209 = vmatpush1.msra.mxu0 0.0
  %210 = vmatprep.subr.mxu0 0.0
  %211 = vmatpush1.msra.mxu0 0.0
  %212 = vmatprep.subr.mxu0 0.0
  %213 = vmatpush1.msra.mxu0 0.0
  %214 = vmatprep.subr.mxu0 0.0
  %215 = vmatpush1.msra.mxu0 0.0
  %216 = vmatprep.subr.mxu0 0.0
  %217 = vmatpush1.msra.mxu0 0.0
  %218 = vmatprep.subr.mxu0 0.0
  %219 = vmatpush1.msra.mxu0 0.0
  %220 = vmatprep.subr.mxu0 0.0
  %221 = vmatpush1.msra.mxu0 0.0
  %222 = vmatprep.subr.mxu0 0.0
  %223 = vmatpush1.msra.mxu0 0.0
  %224 = vmatprep.subr.mxu0 0.0
  %225 = vmatpush1.msra.mxu0 0.0
  %226 = vmatprep.subr.mxu0 0.0
  %227 = vmatpush1.msra.mxu0 0.0
  %228 = vmatprep.subr.mxu0 0.0
  %229 = vmatpush1.msra.mxu0 0.0
  %230 = vmatprep.subr.mxu0 0.0
  %231 = vmatpush1.msra.mxu0 0.0
  %232 = vmatprep.subr.mxu0 0.0
  %233 = vmatpush1.msra.mxu0 0.0
  %234 = vmatprep.subr.mxu0 0.0
  %235 = vmatpush1.msra.mxu0 0.0
  %236 = vmatprep.subr.mxu0 0.0
  %237 = vmatpush1.msra.mxu0 0.0
  %238 = vmatprep.subr.mxu0 0.0
  %239 = vmatpush1.msra.mxu0 0.0
  %240 = vmatprep.subr.mxu0 0.0
  %241 = vmatpush1.msra.mxu0 0.0
  %242 = vmatprep.subr.mxu0 0.0
  %243 = vmatpush1.msra.mxu0 0.0
  %244 = vmatprep.subr.mxu0 0.0
  %245 = vmatpush1.msra.mxu0 0.0
  %246 = vmatprep.subr.mxu0 0.0
  %247 = vmatpush1.msra.mxu0 0.0
  %248 = vmatprep.subr.mxu0 0.0
  %249 = vmatpush1.msra.mxu0 0.0
  %250 = vmatprep.subr.mxu0 0.0
  %251 = vmatpush1.msra.mxu0 0.0
  %252 = vmatprep.subr.mxu0 0.0
  %253 = vmatpush1.msra.mxu0 0.0
  %254 = vmatprep.mubr.f32.mxu0 0.0
  %255 = vmatmul.mubr.f32.gmra.mrb[0].mxu0 %v167
  %v256 = vpop.f32.mrb[0].mxu0
  %v257 = vadd.f32 0.0, %v256
  %v258 = vpop.f32.mrb[0].mxu0
  %259 = vmatprep.mubr.f32.mxu0 0.0
  %260 = vmatmul.mubr.f32.gmra.mrb[0].mxu0 %v170
  %v261 = vpop.f32.mrb[0].mxu0
  %v262 = vadd.f32 0.0, %v261
  %v263 = vpop.f32.mrb[0].mxu0
  %264 = vmatprep.mubr.f32.mxu0 0.0
  %265 = vmatmul.mubr.f32.gmra.mrb[0].mxu0 %v173
  %v266 = vpop.f32.mrb[0].mxu0
  %v267 = vadd.f32 0.0, %v266
  %v268 = vpop.f32.mrb[0].mxu0
  %269 = vmatprep.mubr.f32.mxu0 0.0
  %270 = vmatmul.mubr.f32.gmra.mrb[0].mxu0 %v176
  %v271 = vpop.f32.mrb[0].mxu0
  %v272 = vadd.f32 0.0, %v271
  %v273 = vpop.f32.mrb[0].mxu0
  %274 = vmatprep.mubr.f32.mxu0 0.0
  %275 = vmatmul.mubr.f32.gmra.mrb[0].mxu0 %v179
  %v276 = vpop.f32.mrb[0].mxu0
  %v277 = vadd.f32 0.0, %v276
  %v278 = vpop.f32.mrb[0].mxu0
  %279 = vmatprep.mubr.f32.mxu0 0.0
  %280 = vmatmul.mubr.f32.gmra.mrb[0].mxu0 %v182
  %v281 = vpop.f32.mrb[0].mxu0
  %v282 = vadd.f32 0.0, %v281
  %v283 = vpop.f32.mrb[0].mxu0
  %284 = vmatprep.mubr.f32.mxu0 0.0
  %285 = vmatmul.mubr.f32.gmra.mrb[0].mxu0 %v185
  %v286 = vpop.f32.mrb[0].mxu0
  %v287 = vadd.f32 0.0, %v286
  %v288 = vpop.f32.mrb[0].mxu0
  %289 = vmatprep.mubr.f32.mxu0 0.0
  %290 = vmatmul.mubr.f32.gmra.mrb[0].mxu0 %v188
  %v291 = vpop.f32.mrb[0].mxu0
  %v292 = vadd.f32 0.0, %v291
  %v293 = vpop.f32.mrb[0].mxu0
  %294 = vdwg.mxu0
  %v295 = vmax.f32 %v257, 0.0
  %v296 = vmax.f32 %v262, 0.0
  %v297 = vmax.f32 %v267, 0.0
  %v298 = vmax.f32 %v272, 0.0
  %v299 = vmax.f32 %v277, 0.0
  %v300 = vmax.f32 %v282, 0.0
  %v301 = vmax.f32 %v287, 0.0
  %v302 = vmax.f32 %v292, 0.0
  %v303 = vld [vmem:[%s3] sm:$0xff]
  %v304 = vld [vmem:[%s3 + $0x8] sm:$0xff]
  %v305 = vld [vmem:[%s3 + $0x10] sm:$0xff]
  %v306 = vld [vmem:[%s3 + $0x18] sm:$0xff]
  %vm307 = vcmask 261120
  %v309 = vsel %vm307, %v295, 0
  %v312 = vsel %vm307, %v296, 0
  %v315 = vsel %vm307, %v297, 0
  %v318 = vsel %vm307, %v298, 0
  %v321 = vsel %vm307, %v299, 0
  %v324 = vsel %vm307, %v300, 0
  %v327 = vsel %vm307, %v301, 0
  %v330 = vsel %vm307, %v302, 0
  %332 = vmatprep.subr.mxu0 0.0
  %333 = vmatpush1.msra.mxu0 %v303
  %334 = vmatprep.subr.mxu0 0.0
  %335 = vmatpush1.msra.mxu0 %v304
  %336 = vmatprep.subr.mxu0 0.0
  %337 = vmatpush1.msra.mxu0 %v305
  %338 = vmatprep.subr.mxu0 0.0
  %339 = vmatpush1.msra.mxu0 %v306
  %340 = vmatprep.subr.mxu0 0.0
  %341 = vmatpush1.msra.mxu0 0.0
  %342 = vmatprep.subr.mxu0 0.0
  %343 = vmatpush1.msra.mxu0 0.0
  %344 = vmatprep.subr.mxu0 0.0
  %345 = vmatpush1.msra.mxu0 0.0
  %346 = vmatprep.subr.mxu0 0.0
  %347 = vmatpush1.msra.mxu0 0.0
  %348 = vmatprep.subr.mxu0 0.0
  %349 = vmatpush1.msra.mxu0 0.0
  %350 = vmatprep.subr.mxu0 0.0
  %351 = vmatpush1.msra.mxu0 0.0
  %352 = vmatprep.subr.mxu0 0.0
  %353 = vmatpush1.msra.mxu0 0.0
  %354 = vmatprep.subr.mxu0 0.0
  %355 = vmatpush1.msra.mxu0 0.0
  %356 = vmatprep.subr.mxu0 0.0
  %357 = vmatpush1.msra.mxu0 0.0
  %358 = vmatprep.subr.mxu0 0.0
  %359 = vmatpush1.msra.mxu0 0.0
  %360 = vmatprep.subr.mxu0 0.0
  %361 = vmatpush1.msra.mxu0 0.0
  %362 = vmatprep.subr.mxu0 0.0
  %363 = vmatpush1.msra.mxu0 0.0
  %364 = vmatprep.subr.mxu0 0.0
  %365 = vmatpush1.msra.mxu0 0.0
  %366 = vmatprep.subr.mxu0 0.0
  %367 = vmatpush1.msra.mxu0 0.0
  %368 = vmatprep.subr.mxu0 0.0
  %369 = vmatpush1.msra.mxu0 0.0
  %370 = vmatprep.subr.mxu0 0.0
  %371 = vmatpush1.msra.mxu0 0.0
  %372 = vmatprep.subr.mxu0 0.0
  %373 = vmatpush1.msra.mxu0 0.0
  %374 = vmatprep.subr.mxu0 0.0
  %375 = vmatpush1.msra.mxu0 0.0
  %376 = vmatprep.subr.mxu0 0.0
  %377 = vmatpush1.msra.mxu0 0.0
  %378 = vmatprep.subr.mxu0 0.0
  %379 = vmatpush1.msra.mxu0 0.0
  %380 = vmatprep.subr.mxu0 0.0
  %381 = vmatpush1.msra.mxu0 0.0
  %382 = vmatprep.subr.mxu0 0.0
  %383 = vmatpush1.msra.mxu0 0.0
  %384 = vmatprep.subr.mxu0 0.0
  %385 = vmatpush1.msra.mxu0 0.0
  %386 = vmatprep.subr.mxu0 0.0
  %387 = vmatpush1.msra.mxu0 0.0
  %388 = vmatprep.subr.mxu0 0.0
  %389 = vmatpush1.msra.mxu0 0.0
  %390 = vmatprep.subr.mxu0 0.0
  %391 = vmatpush1.msra.mxu0 0.0
  %392 = vmatprep.subr.mxu0 0.0
  %393 = vmatpush1.msra.mxu0 0.0
  %394 = vmatprep.subr.mxu0 0.0
  %395 = vmatpush1.msra.mxu0 0.0
  %396 = vmatprep.mubr.f32.mxu0 0.0
  %397 = vmatmul.mubr.f32.gmra.mrb[0].mxu0 %v309
  %v398 = vpop.f32.mrb[0].mxu0
  %v399 = vadd.f32 0.0, %v398
  %v400 = vpop.f32.mrb[0].mxu0
  %401 = vmatprep.mubr.f32.mxu0 0.0
  %402 = vmatmul.mubr.f32.gmra.mrb[0].mxu0 %v312
  %v403 = vpop.f32.mrb[0].mxu0
  %v404 = vadd.f32 0.0, %v403
  %v405 = vpop.f32.mrb[0].mxu0
  %406 = vmatprep.mubr.f32.mxu0 0.0
  %407 = vmatmul.mubr.f32.gmra.mrb[0].mxu0 %v315
  %v408 = vpop.f32.mrb[0].mxu0
  %v409 = vadd.f32 0.0, %v408
  %v410 = vpop.f32.mrb[0].mxu0
  %411 = vmatprep.mubr.f32.mxu0 0.0
  %412 = vmatmul.mubr.f32.gmra.mrb[0].mxu0 %v318
  %v413 = vpop.f32.mrb[0].mxu0
  %v414 = vadd.f32 0.0, %v413
  %v415 = vpop.f32.mrb[0].mxu0
  %416 = vmatprep.mubr.f32.mxu0 0.0
  %417 = vmatmul.mubr.f32.gmra.mrb[0].mxu0 %v321
  %v418 = vpop.f32.mrb[0].mxu0
  %v419 = vadd.f32 0.0, %v418
  %v420 = vpop.f32.mrb[0].mxu0
  %421 = vmatprep.mubr.f32.mxu0 0.0
  %422 = vmatmul.mubr.f32.gmra.mrb[0].mxu0 %v324
  %v423 = vpop.f32.mrb[0].mxu0
  %v424 = vadd.f32 0.0, %v423
  %v425 = vpop.f32.mrb[0].mxu0
  %426 = vmatprep.mubr.f32.mxu0 0.0
  %427 = vmatmul.mubr.f32.gmra.mrb[0].mxu0 %v327
  %v428 = vpop.f32.mrb[0].mxu0
  %v429 = vadd.f32 0.0, %v428
  %v430 = vpop.f32.mrb[0].mxu0
  %431 = vmatprep.mubr.f32.mxu0 0.0
  %432 = vmatmul.mubr.f32.gmra.mrb[0].mxu0 %v330
  %v433 = vpop.f32.mrb[0].mxu0
  %v434 = vadd.f32 0.0, %v433
  %v435 = vpop.f32.mrb[0].mxu0
  %436 = vdwg.mxu0
  %437 = vmatprep.subr.mxu0 0.0
  %438 = vmatpush1.msra.mxu0 %v399
  %439 = vmatprep.subr.mxu0 0.0
  %440 = vmatpush1.msra.mxu0 %v404
  %441 = vmatprep.subr.mxu0 0.0
  %442 = vmatpush1.msra.mxu0 %v409
  %443 = vmatprep.subr.mxu0 0.0
  %444 = vmatpush1.msra.mxu0 %v414
  %445 = vmatprep.subr.mxu0 0.0
  %446 = vmatpush1.msra.mxu0 %v419
  %447 = vmatprep.subr.mxu0 0.0
  %448 = vmatpush1.msra.mxu0 %v424
  %449 = vmatprep.subr.mxu0 0.0
  %450 = vmatpush1.msra.mxu0 %v429
  %451 = vmatprep.subr.mxu0 0.0
  %452 = vmatpush1.msra.mxu0 %v434
  %453 = vmatprep.subr.mxu0 0.0
  %454 = vmatpush1.msra.mxu0 0.0
  %455 = vmatprep.subr.mxu0 0.0
  %456 = vmatpush1.msra.mxu0 0.0
  %457 = vmatprep.subr.mxu0 0.0
  %458 = vmatpush1.msra.mxu0 0.0
  %459 = vmatprep.subr.mxu0 0.0
  %460 = vmatpush1.msra.mxu0 0.0
  %461 = vmatprep.subr.mxu0 0.0
  %462 = vmatpush1.msra.mxu0 0.0
  %463 = vmatprep.subr.mxu0 0.0
  %464 = vmatpush1.msra.mxu0 0.0
  %465 = vmatprep.subr.mxu0 0.0
  %466 = vmatpush1.msra.mxu0 0.0
  %467 = vmatprep.subr.mxu0 0.0
  %468 = vmatpush1.msra.mxu0 0.0
  %469 = vmatprep.subr.mxu0 0.0
  %470 = vmatpush1.msra.mxu0 0.0
  %471 = vmatprep.subr.mxu0 0.0
  %472 = vmatpush1.msra.mxu0 0.0
  %473 = vmatprep.subr.mxu0 0.0
  %474 = vmatpush1.msra.mxu0 0.0
  %475 = vmatprep.subr.mxu0 0.0
  %476 = vmatpush1.msra.mxu0 0.0
  %477 = vmatprep.subr.mxu0 0.0
  %478 = vmatpush1.msra.mxu0 0.0
  %479 = vmatprep.subr.mxu0 0.0
  %480 = vmatpush1.msra.mxu0 0.0
  %481 = vmatprep.subr.mxu0 0.0
  %482 = vmatpush1.msra.mxu0 0.0
  %483 = vmatprep.subr.mxu0 0.0
  %484 = vmatpush1.msra.mxu0 0.0
  %485 = vmatprep.subr.mxu0 0.0
  %486 = vmatpush1.msra.mxu0 0.0
  %487 = vmatprep.subr.mxu0 0.0
  %488 = vmatpush1.msra.mxu0 0.0
  %489 = vmatprep.subr.mxu0 0.0
  %490 = vmatpush1.msra.mxu0 0.0
  %491 = vmatprep.subr.mxu0 0.0
  %492 = vmatpush1.msra.mxu0 0.0
  %493 = vmatprep.subr.mxu0 0.0
  %494 = vmatpush1.msra.mxu0 0.0
  %495 = vmatprep.subr.mxu0 0.0
  %496 = vmatpush1.msra.mxu0 0.0
  %497 = vmatprep.subr.mxu0 0.0
  %498 = vmatpush1.msra.mxu0 0.0
  %499 = vmatprep.subr.mxu0 0.0
  %500 = vmatpush1.msra.mxu0 0.0
  %501 = vmatprep.mubr.f32.mxu0 0.0
  %502 = vmatmul.mubr.f32.gmra.mrb[0].mxu0 %v35
  %v503 = vpop.f32.mrb[0].mxu0
  %v504 = vadd.f32 0.0, %v503
  %v505 = vpop.f32.mrb[0].mxu0
  %506 = vmatprep.mubr.f32.mxu0 0.0
  %507 = vmatmul.mubr.f32.gmra.mrb[0].mxu0 %v38
  %v508 = vpop.f32.mrb[0].mxu0
  %v509 = vadd.f32 0.0, %v508
  %v510 = vpop.f32.mrb[0].mxu0
  %511 = vmatprep.mubr.f32.mxu0 0.0
  %512 = vmatmul.mubr.f32.gmra.mrb[0].mxu0 %v41
  %v513 = vpop.f32.mrb[0].mxu0
  %v514 = vadd.f32 0.0, %v513
  %v515 = vpop.f32.mrb[0].mxu0
  %516 = vmatprep.mubr.f32.mxu0 0.0
  %517 = vmatmul.mubr.f32.gmra.mrb[0].mxu0 %v44
  %v518 = vpop.f32.mrb[0].mxu0
  %v519 = vadd.f32 0.0, %v518
  %v520 = vpop.f32.mrb[0].mxu0
  %521 = vmatprep.mubr.f32.mxu0 0.0
  %522 = vmatmul.mubr.f32.gmra.mrb[0].mxu0 %v47
  %v523 = vpop.f32.mrb[0].mxu0
  %v524 = vadd.f32 0.0, %v523
  %v525 = vpop.f32.mrb[0].mxu0
  %526 = vmatprep.mubr.f32.mxu0 0.0
  %527 = vmatmul.mubr.f32.gmra.mrb[0].mxu0 %v50
  %v528 = vpop.f32.mrb[0].mxu0
  %v529 = vadd.f32 0.0, %v528
  %v530 = vpop.f32.mrb[0].mxu0
  %531 = vmatprep.mubr.f32.mxu0 0.0
  %532 = vmatmul.mubr.f32.gmra.mrb[0].mxu0 %v53
  %v533 = vpop.f32.mrb[0].mxu0
  %v534 = vadd.f32 0.0, %v533
  %v535 = vpop.f32.mrb[0].mxu0
  %536 = vmatprep.mubr.f32.mxu0 0.0
  %537 = vmatmul.mubr.f32.gmra.mrb[0].mxu0 %v56
  %v538 = vpop.f32.mrb[0].mxu0
  %v539 = vadd.f32 0.0, %v538
  %v540 = vpop.f32.mrb[0].mxu0
  %541 = vdwg.mxu0
  %v542 = vxor.u32 %v504, 2147483648
  %v543 = vxor.u32 %v509, 2147483648
  %v544 = vxor.u32 %v514, 2147483648
  %v545 = vxor.u32 %v519, 2147483648
  %v546 = vxor.u32 %v524, 2147483648
  %v547 = vxor.u32 %v529, 2147483648
  %v548 = vxor.u32 %v534, 2147483648
  %v549 = vxor.u32 %v539, 2147483648
  %v550 = vmul.f32 %v542, 1.442695
  %v551 = vpow.pop %v550
  %v552 = vmul.f32 %v543, 1.442695
  %v553 = vpow.pop %v552
  %v554 = vmul.f32 %v544, 1.442695
  %v555 = vpow.pop %v554
  %v556 = vmul.f32 %v545, 1.442695
  %v557 = vpow.pop %v556
  %v558 = vmul.f32 %v546, 1.442695
  %v559 = vpow.pop %v558
  %v560 = vmul.f32 %v547, 1.442695
  %v561 = vpow.pop %v560
  %v562 = vmul.f32 %v548, 1.442695
  %v563 = vpow.pop %v562
  %v564 = vmul.f32 %v549, 1.442695
  %v565 = vpow.pop %v564
  %v566 = vadd.f32 %v551, 1.0
  %v567 = vadd.f32 %v553, 1.0
  %v568 = vadd.f32 %v555, 1.0
  %v569 = vadd.f32 %v557, 1.0
  %v570 = vadd.f32 %v559, 1.0
  %v571 = vadd.f32 %v561, 1.0
  %v572 = vadd.f32 %v563, 1.0
  %v573 = vadd.f32 %v565, 1.0
  %v574 = vrcp.pop %v566
  %v575 = vmul.f32 1.0, %v574
  %v576 = vrcp.pop %v567
  %v577 = vmul.f32 1.0, %v576
  %v578 = vrcp.pop %v568
  %v579 = vmul.f32 1.0, %v578
  %v580 = vrcp.pop %v569
  %v581 = vmul.f32 1.0, %v580
  %v582 = vrcp.pop %v570
  %v583 = vmul.f32 1.0, %v582
  %v584 = vrcp.pop %v571
  %v585 = vmul.f32 1.0, %v584
  %v586 = vrcp.pop %v572
  %v587 = vmul.f32 1.0, %v586
  %v588 = vrcp.pop %v573
  %v589 = vmul.f32 1.0, %v588
  %590 = vst.msk [vmem:[%s4] sm:$0xff] %vm165, %v575
  %591 = vst.msk [vmem:[%s4 + $0x8] sm:$0xff] %vm165, %v577
  %592 = vst.msk [vmem:[%s4 + $0x10] sm:$0xff] %vm165, %v579
  %593 = vst.msk [vmem:[%s4 + $0x18] sm:$0xff] %vm165, %v581
  %594 = vst.msk [vmem:[%s4 + $0x20] sm:$0xff] %vm165, %v583
  %595 = vst.msk [vmem:[%s4 + $0x28] sm:$0xff] %vm165, %v585
  %596 = vst.msk [vmem:[%s4 + $0x30] sm:$0xff] %vm165, %v587
  %597 = vst.msk [vmem:[%s4 + $0x38] sm:$0xff] %vm165, %v589
  // Predicated region
  $region18: #{tpu_custom_call.1} parent=0 // pred_check
    _
  $region19: #{tpu_custom_call.1} parent=0 // pred_check_branch
    %599 = sbr.rel (0) target = $region21
  $region20: #{tpu_custom_call.1} parent=0 // pred_region
    _
  $region21: #{tpu_custom_call.1} parent=0 // pred_fallthru
    _
  // Predicated region
  $region22: #{tpu_custom_call.1} parent=0 // pred_check
    _
  $region23: #{tpu_custom_call.1} parent=0 // pred_check_branch
    %601 = sbr.rel (0) target = $region25
  $region24: #{tpu_custom_call.1} parent=0 // pred_region
    _
  $region25: #{tpu_custom_call.1} parent=0 // pred_fallthru
    _

</llo_original>
